<compile_context>
chip_gen: v5e
topology: v5e:2x2
jax: 0.10.0
libtpu: 0.0.40
codegen_flags: <defaults>
</compile_context>

<pallas_src>
import functools
import math

import jax
import jax.numpy as jnp
from jax.experimental import pallas as pl
from jax.experimental.pallas import tpu as pltpu


def layer_scale_init(dim: int, depth: int, dtype=jnp.float32):
    """Deterministic parameter init, matching the PyTorch __init__."""
    if depth <= 18:
        init_eps = 0.1
    elif depth <= 24:
        init_eps = 1e-5
    else:
        init_eps = 1e-6
    return jnp.full((1, 1, dim), init_eps, dtype=dtype)


def _layer_scale_kernel(y_ref, scale_ref, o_ref, *, fn):
    # y_ref:     (TM, L) tile of x (fn applied here, fused)
    # scale_ref: (1,  L) learned per-dim scale, f32 (resident; broadcasts rows)
    # o_ref:     (TM, L) output tile
    y = y_ref[...]
    if fn is not None:
        y = fn(y)  # elementwise; VPU/EUP slots are free under a mem-bound loop
    # Multiply in promoted (f32) precision, cast once on store.
    o_ref[...] = (y * scale_ref[...]).astype(o_ref.dtype)


def _choose_row_tile(rows: int, lanes: int, itemsize: int, sublane: int) -> int:
    """Row-tile size: bytes-targeted, >= 2 balanced grid steps when possible.

    * ~4 MiB per pipelined buffer (per-step overhead amortizes on bytes, not
      rows); total live buffers (2x in + 2x out) ~16 MiB, within every
      generation's scoped-VMEM ceiling.
    * Cap at ~half the rows (rounded to sublane) so the "parallel" axis has at
      least 2 steps for v7x's two TensorCores.
    * Re-balance so all steps are (nearly) equal -> no short tail on one core.
    """
    per_buf_budget = 4 * 1024 * 1024
    tm = max(sublane, (per_buf_budget // (lanes * itemsize)) // sublane * sublane)
    if rows >= 2 * sublane:
        half = ((pl.cdiv(rows, 2) + sublane - 1) // sublane) * sublane
        tm = min(tm, half)
    tm = min(tm, rows)
    n_steps = pl.cdiv(rows, tm)
    tm = ((pl.cdiv(rows, n_steps) + sublane - 1) // sublane) * sublane
    return min(tm, rows)


def _layer_scale_2d(y2, scale_row, fn, out_dtype):
    """Lane-dense 2D body: out[r, l] = fn(y2)[r, l] * scale_row[0, l]."""
    rows, lanes = y2.shape
    itemsize = jnp.dtype(out_dtype).itemsize
    sublane = max(1, 32 // itemsize)      # 8 for f32, 16 for bf16, 32 for int8

    tm = _choose_row_tile(rows, lanes, itemsize, sublane)
    grid = (pl.cdiv(rows, tm),)

    # Footprint-derived VMEM limit: double-buffered in + out + f32 scale,
    # with ~50% headroom (floor 8 MiB keeps Mosaic internal scratch happy).
    block_bytes = tm * lanes * itemsize
    footprint = 4 * block_bytes + 2 * lanes * 4
    vmem_limit = max(8 * 1024 * 1024, int(footprint * 1.5) + (1 << 20))

    total = rows * lanes
    cost = pl.CostEstimate(
        flops=(11 if fn is not None else 1) * total,   # ~10 extra flops/elem for gelu-class fn
        transcendentals=total if fn is not None else 0,
        bytes_accessed=2 * total * itemsize + lanes * 4,
    )

    return pl.pallas_call(
        functools.partial(_layer_scale_kernel, fn=fn),
        out_shape=jax.ShapeDtypeStruct((rows, lanes), out_dtype),
        grid=grid,
        in_specs=[
            pl.BlockSpec((tm, lanes), lambda i: (i, 0)),
            pl.BlockSpec((1, lanes), lambda i: (0, 0)),   # resident scale block
        ],
        out_specs=pl.BlockSpec((tm, lanes), lambda i: (i, 0)),
        compiler_params=pltpu.CompilerParams(
            dimension_semantics=("parallel",),
            vmem_limit_bytes=vmem_limit,
        ),
        cost_estimate=cost,
    )(y2, scale_row)


@functools.partial(jax.jit, static_argnames=("fn",))
def layer_scale(x, scale, fn=None):
    """forward(x) = fn(x) * scale, fused in a single Pallas kernel.

    x:     (B, S, D)
    scale: (1, 1, D)
    fn:    optional ELEMENTWISE callable (e.g. jax.nn.gelu), fused in-kernel.
    """
    # TODO(synk): the original `fn` can be an arbitrary wrapped sub-module
    # (PreNorm/attention/FF); only shape-preserving elementwise fns are fused
    # here. For a general sub-module, apply it outside and call with fn=None.
    B, S, D = x.shape
    dtype = x.dtype
    total = B * S * D

    scale_f32 = scale.reshape(-1).astype(jnp.float32)   # (D,)

    # Lane-dense width: D itself if already 128-aligned, else lcm(D, 128).
    lanes = D if D % 128 == 0 else math.lcm(D, 128)
    scale_row = jnp.tile(scale_f32, lanes // D).reshape(1, lanes)

    flat = x.reshape(-1)
    rows_main = total // lanes
    main_elems = rows_main * lanes

    pieces = []
    if rows_main > 0:
        y2 = flat[:main_elems].reshape(rows_main, lanes)
        out_main = _layer_scale_2d(y2, scale_row, fn, dtype)
        pieces.append(out_main.reshape(-1))
    if main_elems < total:
        # Tiny tail (< lanes elements, multiple of D): handled wrapper-side so
        # the main kernel never pays masked sub-128-lane stores.
        rem = flat[main_elems:].reshape(-1, D)
        rem_y = fn(rem) if fn is not None else rem
        pieces.append((rem_y * scale_f32[None, :]).astype(dtype).reshape(-1))

    out = pieces[0] if len(pieces) == 1 else jnp.concatenate(pieces)
    return out.reshape(B, S, D)


if __name__ == "__main__":
    # Small shapes consistent with the module's (batch, seq, dim) usage.
    B, S, D = 2, 8, 32
    depth = 12  # <= 18  ->  init_eps = 0.1

    key = jax.random.PRNGKey(0)
    x = jax.random.normal(key, (B, S, D), dtype=jnp.float32)
    scale = layer_scale_init(D, depth)

    # 1) Fused elementwise fn (stands in for the wrapped sub-module's nonlinearity).
    fn = jax.nn.gelu
    out = jax.block_until_ready(layer_scale(x, scale, fn=fn))
    ref = fn(x) * scale
    assert out.shape == (B, S, D)
    assert jnp.allclose(out, ref, atol=1e-5, rtol=1e-5)

    # 2) Identity fn path (scale-only).
    out_id = jax.block_until_ready(layer_scale(x, scale, fn=None))
    assert jnp.allclose(out_id, x * scale, atol=1e-6, rtol=1e-6)

    # 3) Lane-aligned D (D % 128 == 0): rows=16 -> 2 balanced grid steps.
    D2 = 128
    x2 = jax.random.normal(jax.random.PRNGKey(0), (B, S, D2), dtype=jnp.float32)
    scale2 = layer_scale_init(D2, depth)
    out2 = jax.block_until_ready(layer_scale(x2, scale2, fn=fn))
    assert jnp.allclose(out2, fn(x2) * scale2, atol=1e-5, rtol=1e-5)

    # 4) Non-divisible remainder path: total % lcm(D,128) != 0.
    B3, S3, D3 = 2, 5, 48          # total=480, lanes=384 -> 1 main row + 96 tail
    x3 = jax.random.normal(jax.random.PRNGKey(0), (B3, S3, D3), dtype=jnp.float32)
    scale3 = layer_scale_init(D3, depth)
    out3 = jax.block_until_ready(layer_scale(x3, scale3, fn=fn))
    assert jnp.allclose(out3, fn(x3) * scale3, atol=1e-5, rtol=1e-5)

    print("KERNEL_OK")
</pallas_src>

<mosaic_0001>
module attributes {stable_mosaic.version = 11 : i64} {
  func.func @_layer_scale_kernel(%arg0: i32, %arg1: memref<4x128xf32, #tpu.memory_space<vmem>>, %arg2: memref<1x128xf32, #tpu.memory_space<vmem>>, %arg3: memref<4x128xf32, #tpu.memory_space<vmem>>) attributes {dimension_semantics = [#tpu.dimension_semantics<parallel>], iteration_bounds = array<i64: 1>, scalar_prefetch = 0 : i64, scratch_operands = 0 : i64, tpu.core_type = #tpu.core_type<tc>, window_params = [{transform_indices = @transform_0, window_bounds = array<i64: 4, 128>}, {pipeline_mode = #tpu.pipeline_mode<synchronous>, transform_indices = @transform_1, window_bounds = array<i64: 1, 128>}, {transform_indices = @transform_2, window_bounds = array<i64: 4, 128>}]} {
    %c0 = arith.constant 0 : index
    %c0_0 = arith.constant 0 : index
    %0 = vector.load %arg1[%c0, %c0_0] : memref<4x128xf32, #tpu.memory_space<vmem>>, vector<4x128xf32>
    %1 = arith.mulf %0, %0 : vector<4x128xf32>
    %2 = arith.mulf %0, %1 : vector<4x128xf32>
    %cst = arith.constant 4.471500e-02 : f32
    %3 = vector.broadcast %cst : f32 to vector<4x128xf32>
    %4 = arith.mulf %3, %2 : vector<4x128xf32>
    %5 = arith.addf %0, %4 : vector<4x128xf32>
    %cst_1 = arith.constant 0.797884583 : f32
    %6 = vector.broadcast %cst_1 : f32 to vector<4x128xf32>
    %7 = arith.mulf %6, %5 : vector<4x128xf32>
    %8 = math.tanh %7 : vector<4x128xf32>
    %cst_2 = arith.constant 1.000000e+00 : f32
    %9 = vector.broadcast %cst_2 : f32 to vector<4x128xf32>
    %10 = arith.addf %9, %8 : vector<4x128xf32>
    %cst_3 = arith.constant 5.000000e-01 : f32
    %11 = vector.broadcast %cst_3 : f32 to vector<4x128xf32>
    %12 = arith.mulf %11, %10 : vector<4x128xf32>
    %13 = arith.mulf %0, %12 : vector<4x128xf32>
    %c0_4 = arith.constant 0 : index
    %c0_5 = arith.constant 0 : index
    %14 = vector.load %arg2[%c0_4, %c0_5] : memref<1x128xf32, #tpu.memory_space<vmem>>, vector<1x128xf32>
    %15 = vector.broadcast %14 : vector<1x128xf32> to vector<4x128xf32>
    %16 = arith.mulf %13, %15 : vector<4x128xf32>
    %c0_6 = arith.constant 0 : index
    %c0_7 = arith.constant 0 : index
    %17 = vector.load %arg3[%c0_6, %c0_7] : memref<4x128xf32, #tpu.memory_space<vmem>>, vector<4x128xf32>
    tpu.vector_store %arg3[%c0_6, %c0_7], %16 {strides = array<i32>} : memref<4x128xf32, #tpu.memory_space<vmem>>, vector<4x128xf32>,
    return
  }
  func.func @transform_0(%arg0: i32) -> (i32, i32) {
    %c0_i32 = arith.constant 0 : i32
    %c0_i32_0 = arith.constant 0 : i32
    return %arg0, %c0_i32 : i32, i32
  }
  func.func @transform_1(%arg0: i32) -> (i32, i32) {
    %c0_i32 = arith.constant 0 : i32
    %c0_i32_0 = arith.constant 0 : i32
    %c0_i32_1 = arith.constant 0 : i32
    return %c0_i32, %c0_i32_0 : i32, i32
  }
  func.func @transform_2(%arg0: i32) -> (i32, i32) {
    %c0_i32 = arith.constant 0 : i32
    %c0_i32_0 = arith.constant 0 : i32
    return %arg0, %c0_i32 : i32, i32
  }
}

</mosaic_0001>

<llo_original>
// kernel: tile.7
$region0: #{tile.7}
  %s0 = inlined_call_operand.vmem [shape: f32[4,32], index: 0, kind: input, shape index: {}]
  %s1 = inlined_call_operand.vmem [shape: f32[1,128], index: 1, kind: output, shape index: {}]
  $region1: #{tile.7} parent=0
    #allocation0 [shape = 'u8[4096]{0}', space=vmem, size = 0x1000, scoped, tag = 'scoped mem for output reshape']
    #allocation1 [shape = 'u8[4096]{0}', space=vmem, size = 0x1000, scoped, tag = 'scoped mem for input reshape']
    %s3 = ssub.s32 16, 1
    %v4 = vld [vmem:[%s0] sm:%s3]
    %5 = vst [vmem:[#allocation1] sm:%s3] %v4
    %v6 = vld [vmem:[#allocation1] sm:$0x1]
    %vm7 = vcmask 261120
    %8 = vst.msk [vmem:[#allocation0] sm:$0x1] %vm7, %v6
    %s9 = scalar_lea.vmem [#allocation1], 3
    %v10 = vld [vmem:[%s9] sm:$0x1]
    %11 = vrot.lane.b32.xlu0 %v10, 96
    %v12 = vpop.permute.xlu0 %11
    %vm13 = vcmask 1048320
    %14 = vst.msk [vmem:[#allocation0] sm:$0x1] %vm13, %v12
    %s15 = scalar_lea.vmem [#allocation1], 2
    %v16 = vld [vmem:[%s15] sm:$0x1]
    %17 = vrot.lane.b32.xlu0 %v16, 64
    %v18 = vpop.permute.xlu0 %17
    %vm19 = vcmask 785920
    %20 = vst.msk [vmem:[#allocation0] sm:$0x1] %vm19, %v18
    %s21 = scalar_lea.vmem [#allocation1], 1
    %v22 = vld [vmem:[%s21] sm:$0x1]
    %23 = vrot.lane.b32.xlu0 %v22, 32
    %v24 = vpop.permute.xlu0 %23
    %vm25 = vcmask 523520
    %26 = vst.msk [vmem:[#allocation0] sm:$0x1] %vm25, %v24
    %s28 = ssub.s32 2, 1
    %v29 = vld [vmem:[#allocation0] sm:%s28]
    %s31 = ssub.s32 2, 1
    %32 = vst [vmem:[%s1] sm:%s31] %v29

// kernel: tile.6
$region0: #{tile.6}
  #allocation0 [shape = 's32[1]{0}', space=sflag, size = 0x4, scoped, tag = 'scoped memory for tile.6']
  %s0 = inlined_call_operand.vmem [shape: f32[32], index: 0, kind: input, shape index: {}]
  %s1 = inlined_call_operand.vmem [shape: f32[4,32], index: 1, kind: output, shape index: {}]
  // Predicated region
  $region2: #{tile.6} parent=0 // pred_check
    _
  $region3: #{tile.6} parent=0 // pred_check_branch
    %3 = sbr.rel (0) target = $region5
  $region4: #{tile.6} parent=0 // pred_region
    _
  $region5: #{tile.6} parent=0 // pred_fallthru
    _
  %v4 = vld [vmem:[%s0] ss:$0 sm:$0xff]
  %5 = vst [vmem:[%s1] sm:$0xf] %v4

// kernel: layer_scale.1
$region0: #{layer_scale.1}
  #allocation0 [shape = 'u32[]', space=smem, size = 0x4, offset = 0x4, fixed_abs, tag = 'smem constant byte address 0x4 - core index']
  #allocation1 [shape = 'u32[72,128]{1,0:T(1,128)}', space=vmem, size = 0x9000, scoped, tag = 'internal scratch']
  %s0 = inlined_call_operand.vmem [shape: f32[4,128], index: 0, kind: input, shape index: {}]
  %s1 = inlined_call_operand.vmem [shape: f32[1,128], index: 1, kind: input, shape index: {}]
  %s2 = inlined_call_operand.vmem [shape: f32[4,128], index: 2, kind: output, shape index: {}]
  %s3 = sld [smem:[#allocation0]]
  $region18: #{layer_scale.1} parent=0
    _
  %s5 = ssub.s32 1, %s3
  %s6 = scalar_select 0, %s5, %s3
  // Predicated region
  $region2: #{layer_scale.1} parent=0 // pred_check
    _
  $region3: #{layer_scale.1} parent=0 // pred_check_branch
    %8 = sbr.rel (0) target = $region5
  $region4: #{layer_scale.1} parent=0 // pred_region
    _
  $region5: #{layer_scale.1} parent=0 // pred_fallthru
    _
  // Predicated region
  $region6: #{layer_scale.1} parent=0 // pred_check
    _
  $region7: #{layer_scale.1} parent=0 // pred_check_branch
    %10 = sbr.rel (0) target = $region9
  $region8: #{layer_scale.1} parent=0 // pred_region
    _
  $region9: #{layer_scale.1} parent=0 // pred_fallthru
    _
  %v11 = vld [vmem:[%s0] sm:$0xf]
  %v12 = vmul.f32 %v11, %v11
  %v13 = vmul.f32 %v11, %v12
  %v14 = vmul.f32 %v13, 0.044715
  %v15 = vadd.f32 %v11, %v14
  %v16 = vmul.f32 %v15, 0.7978846
  %v17 = vtanh.pop %v16
  %v18 = vadd.f32 %v17, 1.0
  %v19 = vmul.f32 %v18, 0.5
  %v20 = vmul.f32 %v11, %v19
  %v21 = vld [vmem:[%s1] sm:$0x1]
  %v23 = vperm.slane %v21, 0
  %v25 = vmul.f32 %v20, %v23
  %26 = vst [vmem:[%s2] sm:$0xf] %v25
  // Predicated region
  $region10: #{layer_scale.1} parent=0 // pred_check
    _
  $region11: #{layer_scale.1} parent=0 // pred_check_branch
    %28 = sbr.rel (0) target = $region13
  $region12: #{layer_scale.1} parent=0 // pred_region
    _
  $region13: #{layer_scale.1} parent=0 // pred_fallthru
    _
  // Predicated region
  $region14: #{layer_scale.1} parent=0 // pred_check
    _
  $region15: #{layer_scale.1} parent=0 // pred_check_branch
    %30 = sbr.rel (0) target = $region17
  $region16: #{layer_scale.1} parent=0 // pred_region
    _
  $region17: #{layer_scale.1} parent=0 // pred_fallthru
    _

</llo_original>
